<compile_context>
chip_gen: v6e
topology: v6e:2x2x1
jax: 0.10.0
libtpu: 0.0.40
codegen_flags: <defaults>
</compile_context>

<pallas_src>
import functools

import jax
import jax.numpy as jnp
from jax.experimental import pallas as pl
from jax.experimental.pallas import tpu as pltpu


def _label_smoothing_kernel(x_ref, t_ref, out_ref, acc_ref, *,
                            confidence, smooth_over_c, n_valid_rows,
                            row_tile, tiles_per_part, last_j):
    p = pl.program_id(0)      # batch partition (parallel across TensorCores)
    j = pl.program_id(1)      # row-tile within the partition (reduction axis)

    @pl.when(j == 0)
    def _():
        acc_ref[...] = jnp.zeros_like(acc_ref)

    x = x_ref[...].astype(jnp.float32)            # (row_tile, C)
    tgt = t_ref[...]                              # (row_tile, 1) int32

    # Numerically-stable logsumexp along the class (lane) axis.
    m = jnp.max(x, axis=-1, keepdims=True)
    lse = m + jnp.log(jnp.sum(jnp.exp(x - m), axis=-1, keepdims=True))

    # Fused weighted lane reduce:
    #   loss = confidence*(lse - x[tgt]) + smoothing*(lse - mean(x))
    #        = lse - confidence*x[tgt] - (smoothing/C)*sum(x)
    #        = lse - sum(w * x),  w = smoothing/C (+ confidence at tgt)
    cls = jax.lax.broadcasted_iota(jnp.int32, x.shape, dimension=1)
    w = jnp.where(cls == tgt, confidence + smooth_over_c, smooth_over_c)
    loss = lse - jnp.sum(w * x, axis=-1, keepdims=True)       # (row_tile, 1)

    # Mask rows beyond the real batch (ragged last tile / clamped overhang
    # tiles read garbage or duplicated data).  Keep this a SELECT so NaN/Inf
    # from garbage rows cannot propagate into the accumulator.
    row = jax.lax.broadcasted_iota(jnp.int32, loss.shape, dimension=0)
    global_row = (p * tiles_per_part + j) * row_tile + row
    loss = jnp.where(global_row < n_valid_rows, loss, 0.0)

    acc_ref[...] += loss

    @pl.when(j == last_j)
    def _():
        # Sublane reduce of the per-row accumulator, splat across the
        # lane-dense (1, 8, 128) output block for this partition.
        total = jnp.sum(acc_ref[...], axis=0, keepdims=True)   # (1, 1)
        out_ref[...] = jnp.broadcast_to(total.reshape(1, 1, 1), out_ref.shape)


def label_smoothing_loss(x, target, smoothing=0.1,
                         *, vmem_budget_bytes=24 * 1024 * 1024):
    """x: (N, C) float, target: (N,) int -> scalar mean loss (float32).

    vmem_budget_bytes is a conservative budget for the pipelined buffers +
    in-kernel temporaries; safe on v7x (64 MiB physical VMEM).  On v5e/v6e
    (128 MiB) it can be raised to ~48-64 MiB for very large vocabularies.
    """
    N, C = x.shape
    confidence = 1.0 - smoothing
    smooth_over_c = smoothing / C

    itemsize = jnp.dtype(x.dtype).itemsize
    # sublane packing: 8 rows for f32, 16 for bf16, 32 for int8/fp8
    sublane = max(8, 32 // itemsize)
    # f32 working copy materialized for sub-32-bit inputs (used by 3 reduces)
    upcast = 4 if itemsize < 4 else 0

    # VMEM bytes per tiled row:
    #   2 * itemsize * C : double-buffered x input blocks
    #   upcast * C       : (row_tile, C) f32 upcast temp for bf16/int8 inputs
    #   ~5 * 128 * 4     : lane-padded (row_tile, 1) refs — target (x2 bufs),
    #                      f32 acc scratch, and small (row, 1) temps
    per_row_bytes = (2 * itemsize + upcast) * C + 5 * 128 * 4
    max_rows = max(sublane, vmem_budget_bytes // per_row_bytes)

    row_tile = max(sublane, (max_rows // sublane) * sublane)
    row_tile = min(row_tile, pl.cdiv(N, sublane) * sublane)   # don't exceed batch

    total_tiles = pl.cdiv(N, row_tile)
    num_parts = 2 if total_tiles >= 2 else 1     # use both TCs on v7x
    tiles_per_part = pl.cdiv(total_tiles, num_parts)
    last_tile = total_tiles - 1

    tgt2d = target.astype(jnp.int32).reshape(N, 1)

    # Overhang grid steps (only when total_tiles is odd and num_parts == 2)
    # clamp to the last real tile; their rows are masked out in-kernel.
    def x_map(p, j):
        return (jnp.minimum(p * tiles_per_part + j, last_tile), 0)

    def t_map(p, j):
        return (jnp.minimum(p * tiles_per_part + j, last_tile), 0)

    kernel = functools.partial(
        _label_smoothing_kernel,
        confidence=confidence, smooth_over_c=smooth_over_c,
        n_valid_rows=N, row_tile=row_tile, tiles_per_part=tiles_per_part,
        last_j=tiles_per_part - 1)

    partials = pl.pallas_call(
        kernel,
        out_shape=jax.ShapeDtypeStruct((num_parts, 8, 128), jnp.float32),
        grid_spec=pltpu.PrefetchScalarGridSpec(
            num_scalar_prefetch=0,
            grid=(num_parts, tiles_per_part),
            in_specs=[
                pl.BlockSpec((row_tile, C), x_map),
                pl.BlockSpec((row_tile, 1), t_map),
            ],
            out_specs=pl.BlockSpec((1, 8, 128), lambda p, j: (p, 0, 0)),
            scratch_shapes=[pltpu.VMEM((row_tile, 1), jnp.float32)],
        ),
        compiler_params=pltpu.CompilerParams(
            dimension_semantics=("parallel", "arbitrary"),
            vmem_limit_bytes=48 * 1024 * 1024),
    )(x, tgt2d)

    # Final reduction over per-core partials + mean over the batch (glue).
    return jnp.sum(partials[:, 0, 0]) / jnp.float32(N)


if __name__ == "__main__":
    key = jax.random.PRNGKey(0)
    kx, kt = jax.random.split(key)

    N, C = 16, 32                       # small shapes: batch=16, vocab=32
    smoothing = 0.1

    x = jax.random.normal(kx, (N, C), dtype=jnp.float32)
    target = jax.random.randint(kt, (N,), 0, C, dtype=jnp.int32)

    out = label_smoothing_loss(x, target, smoothing=smoothing)
    out = jax.block_until_ready(out)

    # pure-JAX reference for sanity
    logprobs = jax.nn.log_softmax(x, axis=-1)
    nll = -jnp.take_along_axis(logprobs, target[:, None], axis=-1)[:, 0]
    smooth = -jnp.mean(logprobs, axis=-1)
    ref = jnp.mean((1.0 - smoothing) * nll + smoothing * smooth)

    assert jnp.allclose(out, ref, atol=1e-5, rtol=1e-5), (out, ref)
    print("KERNEL_OK")
</pallas_src>

<mosaic_0001>
module attributes {stable_mosaic.version = 11 : i64} {
  func.func @_label_smoothing_kernel(%arg0: i32, %arg1: i32, %arg2: memref<16x32xf32, #tpu.memory_space<vmem>>, %arg3: memref<16x1xi32, #tpu.memory_space<vmem>>, %arg4: memref<1x8x128xf32, #tpu.memory_space<vmem>>, %arg5: memref<16x1xf32, #tpu.memory_space<vmem>>) attributes {dimension_semantics = [#tpu.dimension_semantics<parallel>, #tpu.dimension_semantics<arbitrary>], iteration_bounds = array<i64: 1, 1>, scalar_prefetch = 0 : i64, scratch_operands = 1 : i64, tpu.core_type = #tpu.core_type<tc>, window_params = [{transform_indices = @transform_0, window_bounds = array<i64: 16, 32>}, {transform_indices = @transform_1, window_bounds = array<i64: 16, 1>}, {transform_indices = @transform_2, window_bounds = array<i64: 1, 8, 128>}]} {
    %c0_i32 = arith.constant 0 : i32
    %0 = arith.cmpi eq, %arg1, %c0_i32 : i32
    %1 = arith.extui %0 : i1 to i32
    %c0_i32_0 = arith.constant 0 : i32
    %2 = arith.cmpi ne, %1, %c0_i32_0 : i32
    scf.if %2 {
      %cst_16 = arith.constant 0.000000e+00 : f32
      %40 = vector.broadcast %cst_16 : f32 to vector<16x1xf32>
      %c0_17 = arith.constant 0 : index
      %c0_18 = arith.constant 0 : index
      %41 = vector.load %arg5[%c0_17, %c0_18] : memref<16x1xf32, #tpu.memory_space<vmem>>, vector<16x1xf32>
      tpu.vector_store %arg5[%c0_17, %c0_18], %40 {strides = array<i32>} : memref<16x1xf32, #tpu.memory_space<vmem>>, vector<16x1xf32>,
    } else {
    }
    %c0 = arith.constant 0 : index
    %c0_1 = arith.constant 0 : index
    %3 = vector.load %arg2[%c0, %c0_1] : memref<16x32xf32, #tpu.memory_space<vmem>>, vector<16x32xf32>
    %c0_2 = arith.constant 0 : index
    %c0_3 = arith.constant 0 : index
    %4 = vector.load %arg3[%c0_2, %c0_3] : memref<16x1xi32, #tpu.memory_space<vmem>>, vector<16x1xi32>
    %cst = arith.constant dense<0xFF800000> : vector<16xf32>
    %5 = vector.multi_reduction <maximumf>, %3, %cst [1] : vector<16x32xf32> to vector<16xf32>
    %6 = vector.shape_cast %5 : vector<16xf32> to vector<16x1xf32>
    %7 = vector.broadcast %6 : vector<16x1xf32> to vector<16x32xf32>
    %8 = arith.subf %3, %7 : vector<16x32xf32>
    %9 = math.exp %8 : vector<16x32xf32>
    %cst_4 = arith.constant dense<0.000000e+00> : vector<16xf32>
    %10 = vector.multi_reduction <add>, %9, %cst_4 [1] : vector<16x32xf32> to vector<16xf32>
    %11 = vector.shape_cast %10 : vector<16xf32> to vector<16x1xf32>
    %12 = math.log %11 : vector<16x1xf32>
    %13 = arith.addf %6, %12 : vector<16x1xf32>
    %14 = tpu.iota {dimensions = array<i32: 1>} : vector<16x32xi32>
    %15 = vector.broadcast %4 : vector<16x1xi32> to vector<16x32xi32>
    %16 = arith.cmpi eq, %14, %15 : vector<16x32xi32>
    %cst_5 = arith.constant 0.903124988 : f32
    %cst_6 = arith.constant 3.125000e-03 : f32
    %17 = vector.broadcast %cst_5 : f32 to vector<16x32xf32>
    %18 = vector.broadcast %cst_6 : f32 to vector<16x32xf32>
    %19 = arith.select %16, %17, %18 : vector<16x32xi1>, vector<16x32xf32>
    %20 = arith.mulf %19, %3 : vector<16x32xf32>
    %cst_7 = arith.constant dense<0.000000e+00> : vector<16xf32>
    %21 = vector.multi_reduction <add>, %20, %cst_7 [1] : vector<16x32xf32> to vector<16xf32>
    %22 = vector.shape_cast %21 : vector<16xf32> to vector<16x1xf32>
    %23 = arith.subf %13, %22 : vector<16x1xf32>
    %24 = tpu.iota {dimensions = array<i32: 0>} : vector<16x1xi32>
    %c1_i32 = arith.constant 1 : i32
    %25 = arith.muli %arg0, %c1_i32 : i32
    %26 = arith.addi %25, %arg1 : i32
    %c16_i32 = arith.constant 16 : i32
    %27 = arith.muli %26, %c16_i32 : i32
    %28 = vector.broadcast %27 : i32 to vector<16x1xi32>
    %29 = arith.addi %28, %24 : vector<16x1xi32>
    %c16_i32_8 = arith.constant 16 : i32
    %30 = vector.broadcast %c16_i32_8 : i32 to vector<16x1xi32>
    %31 = arith.cmpi slt, %29, %30 : vector<16x1xi32>
    %cst_9 = arith.constant 0.000000e+00 : f32
    %32 = vector.broadcast %cst_9 : f32 to vector<16x1xf32>
    %33 = arith.select %31, %23, %32 : vector<16x1xi1>, vector<16x1xf32>
    %c0_10 = arith.constant 0 : index
    %c0_11 = arith.constant 0 : index
    %34 = vector.load %arg5[%c0_10, %c0_11] : memref<16x1xf32, #tpu.memory_space<vmem>>, vector<16x1xf32>
    %35 = arith.addf %34, %33 : vector<16x1xf32>
    %c0_12 = arith.constant 0 : index
    %c0_13 = arith.constant 0 : index
    %36 = vector.load %arg5[%c0_12, %c0_13] : memref<16x1xf32, #tpu.memory_space<vmem>>, vector<16x1xf32>
    tpu.vector_store %arg5[%c0_12, %c0_13], %35 {strides = array<i32>} : memref<16x1xf32, #tpu.memory_space<vmem>>, vector<16x1xf32>,
    %c0_i32_14 = arith.constant 0 : i32
    %37 = arith.cmpi eq, %arg1, %c0_i32_14 : i32
    %38 = arith.extui %37 : i1 to i32
    %c0_i32_15 = arith.constant 0 : i32
    %39 = arith.cmpi ne, %38, %c0_i32_15 : i32
    scf.if %39 {
      %c0_16 = arith.constant 0 : index
      %c0_17 = arith.constant 0 : index
      %40 = vector.load %arg5[%c0_16, %c0_17] : memref<16x1xf32, #tpu.memory_space<vmem>>, vector<16x1xf32>
      %cst_18 = arith.constant dense<0.000000e+00> : vector<1xf32>
      %41 = vector.multi_reduction <add>, %40, %cst_18 [0] : vector<16x1xf32> to vector<1xf32>
      %42 = vector.shape_cast %41 : vector<1xf32> to vector<1x1xf32>
      %43 = vector.shape_cast %42 : vector<1x1xf32> to vector<1x1x1xf32>
      %44 = vector.shape_cast %43 : vector<1x1x1xf32> to vector<1x1x1xf32>
      %45 = vector.broadcast %44 : vector<1x1x1xf32> to vector<1x8x128xf32>
      %c0_19 = arith.constant 0 : index
      %c0_20 = arith.constant 0 : index
      %c0_21 = arith.constant 0 : index
      %46 = vector.load %arg4[%c0_19, %c0_20, %c0_21] : memref<1x8x128xf32, #tpu.memory_space<vmem>>, vector<1x8x128xf32>
      tpu.vector_store %arg4[%c0_19, %c0_20, %c0_21], %45 {strides = array<i32>} : memref<1x8x128xf32, #tpu.memory_space<vmem>>, vector<1x8x128xf32>,
    } else {
    }
    return
  }
  func.func @transform_0(%arg0: i32, %arg1: i32) -> (i32, i32) {
    %c1_i32 = arith.constant 1 : i32
    %0 = arith.muli %arg0, %c1_i32 : i32
    %1 = arith.addi %0, %arg1 : i32
    %c0_i32 = arith.constant 0 : i32
    %2 = arith.minsi %1, %c0_i32 : i32
    %c0_i32_0 = arith.constant 0 : i32
    %c0_i32_1 = arith.constant 0 : i32
    return %2, %c0_i32_0 : i32, i32
  }
  func.func @transform_1(%arg0: i32, %arg1: i32) -> (i32, i32) {
    %c1_i32 = arith.constant 1 : i32
    %0 = arith.muli %arg0, %c1_i32 : i32
    %1 = arith.addi %0, %arg1 : i32
    %c0_i32 = arith.constant 0 : i32
    %2 = arith.minsi %1, %c0_i32 : i32
    %c0_i32_0 = arith.constant 0 : i32
    %c0_i32_1 = arith.constant 0 : i32
    return %2, %c0_i32_0 : i32, i32
  }
  func.func @transform_2(%arg0: i32, %arg1: i32) -> (i32, i32, i32) {
    %c0_i32 = arith.constant 0 : i32
    %c0_i32_0 = arith.constant 0 : i32
    %c0_i32_1 = arith.constant 0 : i32
    return %arg0, %c0_i32, %c0_i32_0 : i32, i32, i32
  }
}

</mosaic_0001>

<llo_original>
// kernel: tpu_custom_call.1
$region0: #{tpu_custom_call.1}
  #allocation0 [shape = 'u32[]', space=smem, size = 0x4, offset = 0x4, fixed_abs, tag = 'smem constant byte address 0x4 - core index']
  #allocation1 [shape = 'u32[144,128]{1,0:T(1,128)}', space=vmem, size = 0x12000, scoped, tag = 'internal scratch']
  #allocation2 [shape = 'f32[16,1]{1,0:T(8,128)}', space=vmem, size = 0x2000, scoped, tag = 'scratch operand']
  %s0 = inlined_call_operand.vmem [shape: f32[16,32], index: 0, kind: input, shape index: {}]
  %s1 = inlined_call_operand.vmem [shape: s32[16,1], index: 1, kind: input, shape index: {}]
  %s2 = inlined_call_operand.hbm [shape: f32[1,8,128], index: 2, kind: output, shape index: {}]
  %s3 = sld [smem:[#allocation0]]
  $region26: #{tpu_custom_call.1} parent=0
    _
  %s5 = ssub.s32 1, %s3
  %s6 = scalar_select 0, %s5, %s3
  $region1: #{tpu_custom_call.1} parent=0
    #allocation3 [shape = 'u8[4096]{0}', space=vmem, size = 0x1000, scoped, tag = 'output window, operand 0, single buffered']
    #allocation4 [shape = 's32[1]{0}', space=sflag, size = 0x4, scoped, tag = 'scoped memory for tpu_custom_call.1']
    %7 = vsyncpa [#allocation4], 0
    // Predicated region
    $region2: #{tpu_custom_call.1} parent=1 // pred_check
      _
    $region3: #{tpu_custom_call.1} parent=1 // pred_check_branch
      %9 = sbr.rel (0) target = $region5
    $region4: #{tpu_custom_call.1} parent=1 // pred_region
      %s10 = sadd.s32 0, 0
      %p11 = scmp.lt.s32.totalorder %s10, 0
      %s12 = scalar_select %p11, %s10, 0
      %s13 = smul.u32 2, %s12
      %p14 = scmp.lt.s32.totalorder %s13, 1
      %s15 = scalar_select %p14, %s13, 1
      %s16 = smul.addr %s15, 8
      %s17 = scalar_lea.vmem %s0, %s16
      %s18 = sadd.s32 0, 0
      %p19 = scmp.lt.s32.totalorder %s18, 0
      %s20 = scalar_select %p19, %s18, 0
      %s21 = smul.u32 2, %s20
    $region5: #{tpu_custom_call.1} parent=1 // pred_fallthru
      _
    // Predicated region
    $region6: #{tpu_custom_call.1} parent=1 // pred_check
      _
    $region7: #{tpu_custom_call.1} parent=1 // pred_check_branch
      %23 = sbr.rel (0) target = $region9
    $region8: #{tpu_custom_call.1} parent=1 // pred_region
      %s24 = sadd.s32 0, 0
      %p25 = scmp.lt.s32.totalorder %s24, 0
      %s26 = scalar_select %p25, %s24, 0
      %s27 = smul.u32 2, %s26
      %p28 = scmp.lt.s32.totalorder %s27, 1
      %s29 = scalar_select %p28, %s27, 1
      %s30 = smul.addr %s29, 8
      %s31 = scalar_lea.vmem %s1, %s30
      %s32 = sadd.s32 0, 0
      %p33 = scmp.lt.s32.totalorder %s32, 0
      %s34 = scalar_select %p33, %s32, 0
      %s35 = smul.u32 2, %s34
    $region9: #{tpu_custom_call.1} parent=1 // pred_fallthru
      _
    %s36 = sadd.s32 0, 0
    %p37 = scmp.lt.s32.totalorder %s36, 0
    %s38 = scalar_select %p37, %s36, 0
    %s39 = smul.u32 2, %s38
    %p40 = scmp.lt.s32.totalorder %s39, 1
    %s41 = scalar_select %p40, %s39, 1
    %s42 = smul.addr %s41, 8
    %s43 = scalar_lea.vmem %s0, %s42
    %s44 = sadd.s32 0, 0
    %p45 = scmp.lt.s32.totalorder %s44, 0
    %s46 = scalar_select %p45, %s44, 0
    %s47 = smul.u32 2, %s46
    %p48 = scmp.lt.s32.totalorder %s47, 1
    %s49 = scalar_select %p48, %s47, 1
    %s50 = smul.addr %s49, 8
    %s51 = scalar_lea.vmem %s1, %s50
    %s52 = sadd.s32 0, 0
    %p53 = scmp.lt.s32.totalorder %s52, 0
    %s54 = scalar_select %p53, %s52, 0
    %s55 = smul.u32 2, %s54
    %p56 = scmp.lt.s32.totalorder %s55, 1
    %s57 = scalar_select %p56, %s55, 1
    %s58 = smul.addr %s57, 8
    %s59 = scalar_lea.vmem %s0, %s58
    %s60 = sadd.s32 0, 0
    %p61 = scmp.lt.s32.totalorder %s60, 0
    %s62 = scalar_select %p61, %s60, 0
    %s63 = smul.u32 2, %s62
    %s64 = sadd.s32 0, 0
    %p65 = scmp.lt.s32.totalorder %s64, 0
    %s66 = scalar_select %p65, %s64, 0
    %s67 = smul.u32 2, %s66
    %p68 = scmp.lt.s32.totalorder %s67, 1
    %s69 = scalar_select %p68, %s67, 1
    %s70 = smul.addr %s69, 8
    %s71 = scalar_lea.vmem %s1, %s70
    %s72 = sadd.s32 0, 0
    %p73 = scmp.lt.s32.totalorder %s72, 0
    %s74 = scalar_select %p73, %s72, 0
    %s75 = smul.u32 2, %s74
    %p76 = scmp.eq.s32.totalorder 0, 0
    // Predicated region
    $region10: #{tpu_custom_call.1} parent=1 // pred_check
      %p77 = pneg %p76
    $region11: #{tpu_custom_call.1} parent=1 // pred_check_branch
      %79 = sbr.rel (%p77) target = $region13
    $region12: #{tpu_custom_call.1} parent=1 // pred_region
      %vm80 = vcmask 7168
      %81 = vst.msk [vmem:[#allocation2] sm:$0xff] %vm80, 0.0
      %82 = vst.msk [vmem:[#allocation2 + $0x8] sm:$0xff] %vm80, 0.0
    $region13: #{tpu_custom_call.1} parent=1 // pred_fallthru
      _
    %v83 = vld [vmem:[%s59] sm:$0xff]
    %v84 = vld [vmem:[%s59 + $0x8] sm:$0xff]
    %v85 = vld [vmem:[%s71] sm:$0xff]
    %v86 = vld [vmem:[%s71 + $0x8] sm:$0xff]
    %vm87 = vcmask 261120
    %v88 = vsel %vm87, %v83, -inf
    %89 = vmax.xlane.f32.xlu0 %v88
    %v90 = vpop.xlane.xlu0 %89
    %v91 = vsel %vm87, %v84, -inf
    %92 = vmax.xlane.f32.xlu0 %v91
    %v93 = vpop.xlane.xlu0 %92
    %v94 = vsub.f32 %v83, %v90
    %v95 = vsub.f32 %v84, %v93
    %v96 = vmul.f32 %v94, 1.442695
    %v97 = vpow.pop %v96
    %v98 = vmul.f32 %v95, 1.442695
    %v99 = vpow.pop %v98
    %v100 = vsel %vm87, %v97, 0.0
    %101 = vadd.xlane.f32.xlu0 %v100
    %v102 = vpop.xlane.xlu0 %101
    %v103 = vsel %vm87, %v99, 0.0
    %104 = vadd.xlane.f32.xlu0 %v103
    %v105 = vpop.xlane.xlu0 %104
    %v106 = vlog2.pop %v102
    %v107 = vmul.f32 %v106, 0.6931472
    %v108 = vlog2.pop %v105
    %v109 = vmul.f32 %v108, 0.6931472
    %v110 = vadd.f32 %v90, %v107
    %v111 = vadd.f32 %v93, %v109
    %v112 = vlaneseq
    %v113 = vand.u32 %v112, 127
    %114 = vset.pattern.permute.xlu0 0
    %115 = vperm.xlu0 %114, %v85
    %v116 = vpop.permute.xlu0 %115
    %117 = vset.pattern.permute.xlu0 0
    %118 = vperm.xlu0 %117, %v86
    %v119 = vpop.permute.xlu0 %118
    %vm120 = vcmp.eq.s32.totalorder %v113, %v116
    %vm121 = vcmp.eq.s32.totalorder %v113, %v119
    %v122 = vsel %vm120, 0.903125, 0.003125
    %v123 = vsel %vm121, 0.903125, 0.003125
    %v124 = vmul.f32 %v122, %v83
    %v125 = vmul.f32 %v123, %v84
    %v126 = vsel %vm87, %v124, 0.0
    %127 = vadd.xlane.f32.xlu0 %v126
    %v128 = vpop.xlane.xlu0 %127
    %v129 = vsel %vm87, %v125, 0.0
    %130 = vadd.xlane.f32.xlu0 %v129
    %v131 = vpop.xlane.xlu0 %130
    %v132 = vsub.f32 %v110, %v128
    %v133 = vsub.f32 %v111, %v131
    %v134 = vlaneseq
    %v135 = vshrl.u32 %v134, 7
    %v136 = vadd.s32 %v135, 8
    %s137 = sadd.s32 0, 0
    %s138 = smul.u32 %s137, 16
    %v139 = vstv %s138
    %v140 = vadd.s32 %v139, %v135
    %v141 = vadd.s32 %v139, %v136
    %vm142 = vcmp.lt.s32.totalorder %v140, 16
    %vm143 = vcmp.lt.s32.totalorder %v141, 16
    %v144 = vsel %vm142, %v132, 0.0
    %v145 = vsel %vm143, %v133, 0.0
    %v146 = vld [vmem:[#allocation2] sm:$0xff]
    %v147 = vld [vmem:[#allocation2 + $0x8] sm:$0xff]
    %v148 = vadd.f32 %v146, %v144
    %v149 = vadd.f32 %v147, %v145
    %vm150 = vcmask 7168
    %151 = vst.msk [vmem:[#allocation2] sm:$0xff] %vm150, %v148
    %152 = vst.msk [vmem:[#allocation2 + $0x8] sm:$0xff] %vm150, %v149
    // Predicated region
    $region14: #{tpu_custom_call.1} parent=1 // pred_check
      %p153 = pneg %p76
    $region15: #{tpu_custom_call.1} parent=1 // pred_check_branch
      %155 = sbr.rel (%p153) target = $region17
    $region16: #{tpu_custom_call.1} parent=1 // pred_region
      %v156 = vld [vmem:[#allocation2] sm:$0xff]
      %v157 = vld [vmem:[#allocation2 + $0x8] sm:$0xff]
      %v158 = vsel %vm150, %v156, 0.0
      %v159 = vsel %vm150, %v157, 0.0
      %v160 = vadd.f32 %v158, %v159
      %v161 = vrot.slane %v160, 4
      %v162 = vadd.f32 %v160, %v161
      %v163 = vrot.slane %v162, 2
      %v164 = vadd.f32 %v162, %v163
      %v165 = vrot.slane %v164, 1
      %v166 = vadd.f32 %v164, %v165
      %168 = vset.pattern.permute.xlu0 0
      %169 = vperm.xlu0 %168, %v166
      %v170 = vpop.permute.xlu0 %169
      %172 = vst [vmem:[#allocation3] sm:$0xff] %v170
    $region17: #{tpu_custom_call.1} parent=1 // pred_fallthru
      _
    // Predicated region
    $region18: #{tpu_custom_call.1} parent=1 // pred_check
      _
    $region19: #{tpu_custom_call.1} parent=1 // pred_check_branch
      %174 = sbr.rel (0) target = $region21
    $region20: #{tpu_custom_call.1} parent=1 // pred_region
      %s176 = ssub.s32 128, 128
      %177 = vsyncadd [#allocation4], %s176
      %s179 = sshll.u32 [#allocation3], 4
      %s180 = int_to_ptr.vmem [resolvable:$true] %s179
      %182 = dma.vmem_to_hbm [thread:$0]  %s180, 128, %s2, [#allocation4]
    $region21: #{tpu_custom_call.1} parent=1 // pred_fallthru
      _
    // Predicated region
    $region22: #{tpu_custom_call.1} parent=1 // pred_check
      _
    $region23: #{tpu_custom_call.1} parent=1 // pred_check_branch
      %184 = sbr.rel (0) target = $region25
    $region24: #{tpu_custom_call.1} parent=1 // pred_region
      %185 = dma.done [#allocation4], 128
    $region25: #{tpu_custom_call.1} parent=1 // pred_fallthru
      _
    %186 = vsyncpa [#allocation4], 1

</llo_original>
